<compile_context>
chip_gen: v7x
topology: tpu7x:2x2x1
jax: 0.10.0
libtpu: 0.0.40
codegen_flags: <defaults>
</compile_context>

<pallas_src>
import math

import jax
import jax.numpy as jnp
from jax.experimental import pallas as pl
from jax.experimental.pallas import tpu as pltpu

SELU_ALPHA = 1.6732632423543772
SELU_SCALE = 1.0507009873554805
BN_EPS = 1e-5
_CHUNK = 512                      # lane-chunk of the point axis inside stage 1
_VMEM_LIMIT = 32 * 1024 * 1024


def _selu(v):
    # Branch-free SELU: scale * (max(v,0) + alpha*(exp(min(v,0)) - 1)).
    return SELU_SCALE * (jnp.maximum(v, 0.0)
                         + SELU_ALPHA * (jnp.exp(jnp.minimum(v, 0.0)) - 1.0))


# ---------------------------------------------------------------------------
# Stage 1: heavy batch-tiled pass.
#   u_c = max(v,0) + alpha*exp(min(v,0)),  v = conv_w[c]*x + conv_b[c]
#   (SELU = scale*(u - alpha); scale/shift folded out, see wrapper algebra)
#   acc_c = u_c @ [s*wf_c0, s*wf_c1, 1, 0]  +  u_c^2 @ [0,0,0,1]     (MXU)
#   fc_out rows   <- acc_c[:, 0:2]              (per-row fused FC products)
#   stat_out tile <- column-sum of acc_c[:, 2:4] (per-tile BN partial sums)
# ---------------------------------------------------------------------------
def _stage1_kernel(conv_w_ref, conv_b_ref, x_ref, wu_ref, wq_ref,
                   fc_ref, stat_ref):
    tb, P = x_ref.shape
    nck = (P + _CHUNK - 1) // _CHUNK
    accs = [jnp.zeros((tb, 4), jnp.float32) for _ in range(2)]
    for j in range(nck):                               # static chunk loop over P
        lo = j * _CHUNK
        hi = min(lo + _CHUNK, P)
        xs = x_ref[:, lo:hi].astype(jnp.float32)       # in-kernel f32 cast
        for c in range(2):                             # static 2-channel loop
            v = xs * conv_w_ref[c] + conv_b_ref[c]     # Conv1d(1,2,k=1)
            u = jnp.maximum(v, 0.0) + SELU_ALPHA * jnp.exp(jnp.minimum(v, 0.0))
            accs[c] = (accs[c]
                       + jnp.dot(u, wu_ref[lo:hi, 4 * c:4 * c + 4],
                                 preferred_element_type=jnp.float32)
                       + jnp.dot(u * u, wq_ref[lo:hi, :],
                                 preferred_element_type=jnp.float32))
    # single lane-dense (tb,4) write of the fused-FC raw products
    fc_ref[...] = jnp.concatenate([accs[0][:, 0:2], accs[1][:, 0:2]], axis=1)
    # per-tile BN stat partials: [sum_u0, sum_u0^2, sum_u1, sum_u1^2]
    st = jnp.concatenate(
        [jnp.sum(accs[0][:, 2:4], axis=0, keepdims=True),
         jnp.sum(accs[1][:, 2:4], axis=0, keepdims=True)], axis=1)       # (1,4)
    stat_ref[...] = jnp.broadcast_to(st, (8, 4))       # fill the 8-row block


# ---------------------------------------------------------------------------
# Stage 2: tiny per-row epilogue (folded BN scale/bias from SMEM scalars).
#   pre_o = inv0*fc[:,o] + inv1*fc[:,2+o] + bprime_o ; h = SELU(pre)
#   out   = h0*Wend[0,:] + h1*Wend[1,:] + bend   (or a real dot if out_dim>=128)
# ---------------------------------------------------------------------------
def _make_stage2_kernel(use_dot):
    def kernel(scal_ref, fc_ref, wend_ref, bend_ref, o_ref):
        inv0 = scal_ref[0]
        inv1 = scal_ref[1]
        pre0 = fc_ref[:, 0:1] * inv0 + fc_ref[:, 2:3] * inv1 + scal_ref[2]
        pre1 = fc_ref[:, 1:2] * inv0 + fc_ref[:, 3:4] * inv1 + scal_ref[3]
        h0 = _selu(pre0)
        h1 = _selu(pre1)
        if use_dot:
            h = jnp.concatenate([h0, h1], axis=1)
            o_ref[...] = (jnp.dot(h, wend_ref[...],
                                  preferred_element_type=jnp.float32)
                          + bend_ref[...])
        else:
            o_ref[...] = (h0 * wend_ref[0:1, :] + h1 * wend_ref[1:2, :]
                          + bend_ref[...])
    return kernel


def _choose_tiling(batch, row_bytes, cap=1024, budget_bytes=5 << 20):
    """Pick (tile_b, padded_batch): VMEM-safe, (8,128)-legal, >=2 grid steps
    when the batch allows (dual-TC on v7x), bounded padding otherwise."""
    cap = min(cap, budget_bytes // max(int(row_bytes), 1))
    if batch >= 16:
        cap = min(cap, batch // 2)            # guarantee >= 2 grid steps
    cap = max(8, (cap // 8) * 8)
    if batch <= cap:
        return batch, batch                   # block == full dim -> always legal
    max_waste = batch // 8 + 8
    for t in range(cap, 7, -8):
        padded = ((batch + t - 1) // t) * t
        if padded - batch <= max_waste:
            return t, padded
    return 8, ((batch + 7) // 8) * 8          # unreachable fallback


def mecnn_aes_hd_forward(x, params):
    conv_w, conv_b, wfc, bfc, wend, bend = params
    B = x.shape[0]
    x = x.reshape(B, -1)                      # == .view(B,1,-1); f32 cast in-kernel
    P = x.shape[1]
    half = P // 2
    in_f = 2 * half
    out_dim = wend.shape[0]
    out_pad = pl.cdiv(out_dim, 128) * 128     # lane-dense padded output width

    conv_w32 = conv_w.astype(jnp.float32)
    conv_b32 = conv_b.astype(jnp.float32)
    bfc32 = bfc.astype(jnp.float32)

    # --- Fuse AvgPool1d(2) + SELU scale into the fullc weights ---
    wfcT = wfc.T.astype(jnp.float32)                          # (in_f, 2)
    w0 = 0.5 * jnp.repeat(wfcT[:half], 2, axis=0)             # (2*half, 2)
    w1 = 0.5 * jnp.repeat(wfcT[half:], 2, axis=0)
    if P > in_f:                                              # odd P: last pos unused by pool
        zpad = jnp.zeros((P - in_f, 2), jnp.float32)
        w0 = jnp.concatenate([w0, zpad], axis=0)
        w1 = jnp.concatenate([w1, zpad], axis=0)
    ones_col = jnp.ones((P, 1), jnp.float32)
    zero_col = jnp.zeros((P, 1), jnp.float32)
    # per-channel N=4 groups: [s*wf_c0, s*wf_c1, 1 (sum u), 0]
    wu = jnp.concatenate([SELU_SCALE * w0, ones_col, zero_col,
                          SELU_SCALE * w1, ones_col, zero_col], axis=1)   # (P,8)
    # u^2 stat weights (same for both channels): [0, 0, 0, 1 (sum u^2)]
    wq = jnp.concatenate([zero_col, zero_col, zero_col, ones_col], axis=1)  # (P,4)
    # per-channel column sums of the (unscaled) fused weights, for the BN mean fold
    colsum = wfcT.reshape(2, half, 2).sum(axis=1)             # (2, 2)

    smem = pltpu.MemorySpace.SMEM

    # ------------------------------ Stage 1 ------------------------------
    tb1, B_pad = _choose_tiling(B, P * 4)
    if B_pad > B:
        x = jnp.concatenate([x, jnp.zeros((B_pad - B, P), x.dtype)], axis=0)
    G = B_pad // tb1

    fc_out, stat_out = pl.pallas_call(
        _stage1_kernel,
        out_shape=(jax.ShapeDtypeStruct((B_pad, 4), jnp.float32),
                   jax.ShapeDtypeStruct((G * 8, 4), jnp.float32)),
        grid=(G,),
        in_specs=[
            pl.BlockSpec(memory_space=smem),                  # conv weight (2,)
            pl.BlockSpec(memory_space=smem),                  # conv bias   (2,)
            pl.BlockSpec((tb1, P), lambda i: (i, 0)),         # x batch tile (native dtype)
            pl.BlockSpec((P, 8), lambda i: (0, 0)),           # fused FC + sum(u) weights
            pl.BlockSpec((P, 4), lambda i: (0, 0)),           # sum(u^2) weights
        ],
        out_specs=(pl.BlockSpec((tb1, 4), lambda i: (i, 0)),  # per-row FC products
                   pl.BlockSpec((8, 4), lambda i: (i, 0))),   # per-tile BN partials
        compiler_params=pltpu.CompilerParams(
            dimension_semantics=("parallel",),
            vmem_limit_bytes=_VMEM_LIMIT),
    )(conv_w32, conv_b32, x, wu, wq)

    # ---- BatchNorm train-mode stats (u-space) folded into scale / bias ----
    stats = stat_out[0::8].sum(axis=0)                        # (4,) sum of tile partials
    sum_u = jnp.stack([stats[0], stats[2]])
    sum_q = jnp.stack([stats[1], stats[3]])
    pad_rows = B_pad - B
    if pad_rows:                                              # remove zero-padded rows' contribution
        u_pad = (jnp.maximum(conv_b32, 0.0)
                 + SELU_ALPHA * jnp.exp(jnp.minimum(conv_b32, 0.0)))
        sum_u = sum_u - pad_rows * P * u_pad
        sum_q = sum_q - pad_rows * P * u_pad * u_pad
    n = jnp.float32(B * P)
    mean_u = sum_u / n
    # NOTE: E[u^2]-E[u]^2 in f32 can lose precision for huge B*P; the per-tile
    # partials keep intermediate sums bounded and eps absorbs the residual.
    var_y = (SELU_SCALE ** 2) * jnp.maximum(sum_q / n - mean_u * mean_u, 0.0)
    inv = jax.lax.rsqrt(var_y + BN_EPS)                       # (2,)
    bprime = (bfc32
              - SELU_SCALE * (inv[0] * mean_u[0] * colsum[0]
                              + inv[1] * mean_u[1] * colsum[1]))          # (2,)
    scal = jnp.concatenate([inv, bprime])                     # (4,) SMEM scalars

    wend_p = jnp.zeros((2, out_pad), jnp.float32).at[:, :out_dim].set(
        wend.T.astype(jnp.float32))
    bend_p = jnp.zeros((1, out_pad), jnp.float32).at[:, :out_dim].set(
        bend.astype(jnp.float32).reshape(1, -1))

    # ------------------------------ Stage 2 ------------------------------
    tb2 = tb1                                                 # divides B_pad by construction
    out = pl.pallas_call(
        _make_stage2_kernel(out_dim >= 128),
        out_shape=jax.ShapeDtypeStruct((B_pad, out_pad), jnp.float32),
        grid=(B_pad // tb2,),
        in_specs=[
            pl.BlockSpec(memory_space=smem),                  # [inv0, inv1, b'0, b'1]
            pl.BlockSpec((tb2, 4), lambda i: (i, 0)),         # stage-1 FC products
            pl.BlockSpec((2, out_pad), lambda i: (0, 0)),     # fc_end weight (padded)
            pl.BlockSpec((1, out_pad), lambda i: (0, 0)),     # fc_end bias (padded)
        ],
        out_specs=pl.BlockSpec((tb2, out_pad), lambda i: (i, 0)),
        compiler_params=pltpu.CompilerParams(
            dimension_semantics=("parallel",),
            vmem_limit_bytes=_VMEM_LIMIT),
    )(scal, fc_out, wend_p, bend_p)

    return out[:B, :out_dim]


# ----------------------- parameter init (matches module.initialize()) -------
def kaiming_uniform(key, shape, fan_in):
    # nn.init.kaiming_uniform_ default a=0 -> gain = sqrt(2)
    bound = math.sqrt(2.0) * math.sqrt(3.0 / fan_in)
    return jax.random.uniform(key, shape, jnp.float32, -bound, bound)


def init_params(key, point_num, out_dim):
    k1, k2, k3 = jax.random.split(key, 3)
    conv_w = kaiming_uniform(k1, (2,), fan_in=1)        # Conv1d(1,2,1) weight (2,1,1)
    conv_b = jnp.zeros((2,), jnp.float32)
    in_f = (point_num // 2) * 2
    wfc = kaiming_uniform(k2, (2, in_f), fan_in=in_f)   # Linear(in_f, 2)
    bfc = jnp.zeros((2,), jnp.float32)
    wend = kaiming_uniform(k3, (out_dim, 2), fan_in=2)  # Linear(2, out_dim)
    bend = jnp.zeros((out_dim,), jnp.float32)
    return conv_w, conv_b, wfc, bfc, wend, bend


# ----------------------- pure-JAX reference (for self-check) ----------------
def _reference_forward(x, params):
    conv_w, conv_b, wfc, bfc, wend, bend = params
    B = x.shape[0]
    xf = x.reshape(B, 1, -1).astype(jnp.float32)
    y = _selu(xf * conv_w.reshape(1, 2, 1) + conv_b.reshape(1, 2, 1))   # (B,2,P)
    mean = y.mean(axis=(0, 2), keepdims=True)
    var = ((y - mean) ** 2).mean(axis=(0, 2), keepdims=True)            # biased
    z = (y - mean) * jax.lax.rsqrt(var + BN_EPS)
    half = z.shape[2] // 2
    pooled = 0.5 * (z[:, :, 0:2 * half:2] + z[:, :, 1:2 * half:2])      # AvgPool1d(2)
    h = _selu(pooled.reshape(B, -1) @ wfc.T + bfc)
    return h @ wend.T + bend


if __name__ == "__main__":
    B, POINT_NUM, OUT_DIM = 4, 16, 8
    key = jax.random.PRNGKey(0)
    kx, kp = jax.random.split(key)
    x = jax.random.normal(kx, (B, POINT_NUM), jnp.float32)
    params = init_params(kp, POINT_NUM, OUT_DIM)

    y = mecnn_aes_hd_forward(x, params)
    jax.block_until_ready(y)
    assert y.shape == (B, OUT_DIM)
    assert y.dtype == jnp.float32

    y_ref = _reference_forward(x, params)
    assert jnp.allclose(y, y_ref, atol=1e-3, rtol=1e-3)
    print("KERNEL_OK")
</pallas_src>

<mosaic_0001>
module attributes {stable_mosaic.version = 11 : i64} {
  func.func @_stage1_kernel(%arg0: i32, %arg1: memref<2xf32, #tpu.memory_space<smem>>, %arg2: memref<2xf32, #tpu.memory_space<smem>>, %arg3: memref<4x16xf32, #tpu.memory_space<vmem>>, %arg4: memref<16x8xf32, #tpu.memory_space<vmem>>, %arg5: memref<16x4xf32, #tpu.memory_space<vmem>>, %arg6: memref<4x4xf32, #tpu.memory_space<vmem>>, %arg7: memref<8x4xf32, #tpu.memory_space<vmem>>) attributes {dimension_semantics = [#tpu.dimension_semantics<parallel>], iteration_bounds = array<i64: 1>, scalar_prefetch = 0 : i64, scratch_operands = 0 : i64, tpu.core_type = #tpu.core_type<tc>, window_params = [{transform_indices = @transform_0, window_bounds = array<i64: 2>}, {transform_indices = @transform_1, window_bounds = array<i64: 2>}, {transform_indices = @transform_2, window_bounds = array<i64: 4, 16>}, {pipeline_mode = #tpu.pipeline_mode<synchronous>, transform_indices = @transform_3, window_bounds = array<i64: 16, 8>}, {pipeline_mode = #tpu.pipeline_mode<synchronous>, transform_indices = @transform_4, window_bounds = array<i64: 16, 4>}, {transform_indices = @transform_5, window_bounds = array<i64: 4, 4>}, {transform_indices = @transform_6, window_bounds = array<i64: 8, 4>}]} {
    %cst = arith.constant 0.000000e+00 : f32
    %0 = vector.broadcast %cst : f32 to vector<4x4xf32>
    %cst_0 = arith.constant 0.000000e+00 : f32
    %1 = vector.broadcast %cst_0 : f32 to vector<4x4xf32>
    %c0 = arith.constant 0 : index
    %c0_1 = arith.constant 0 : index
    %2 = vector.load %arg3[%c0, %c0_1] : memref<4x16xf32, #tpu.memory_space<vmem>>, vector<4x16xf32>
    %c0_2 = arith.constant 0 : index
    %3 = memref.load %arg1[%c0_2] : memref<2xf32, #tpu.memory_space<smem>>
    %4 = vector.broadcast %3 : f32 to vector<4x16xf32>
    %5 = arith.mulf %2, %4 : vector<4x16xf32>
    %c0_3 = arith.constant 0 : index
    %6 = memref.load %arg2[%c0_3] : memref<2xf32, #tpu.memory_space<smem>>
    %7 = vector.broadcast %6 : f32 to vector<4x16xf32>
    %8 = arith.addf %5, %7 : vector<4x16xf32>
    %cst_4 = arith.constant 0.000000e+00 : f32
    %9 = vector.broadcast %cst_4 : f32 to vector<4x16xf32>
    %10 = arith.maximumf %8, %9 : vector<4x16xf32>
    %cst_5 = arith.constant 0.000000e+00 : f32
    %11 = vector.broadcast %cst_5 : f32 to vector<4x16xf32>
    %12 = arith.minimumf %8, %11 : vector<4x16xf32>
    %13 = math.exp %12 : vector<4x16xf32>
    %cst_6 = arith.constant 1.67326319 : f32
    %14 = vector.broadcast %cst_6 : f32 to vector<4x16xf32>
    %15 = arith.mulf %14, %13 : vector<4x16xf32>
    %16 = arith.addf %10, %15 : vector<4x16xf32>
    %c0_7 = arith.constant 0 : index
    %c0_8 = arith.constant 0 : index
    %17 = vector.load %arg4[%c0_7, %c0_8] : memref<16x8xf32, #tpu.memory_space<vmem>>, vector<16x4xf32>
    %cst_9 = arith.constant dense<0.000000e+00> : vector<4x4xf32>
    %18 = tpu.matmul %16, %17, %cst_9 {dimension_numbers = #tpu.dot_dimension_numbers<[1], [0], [0], [1], [0, 0, 1, 1], [], []>} : vector<4x16xf32>, vector<16x4xf32>, vector<4x4xf32> -> vector<4x4xf32>
    %19 = arith.addf %0, %18 : vector<4x4xf32>
    %20 = arith.mulf %16, %16 : vector<4x16xf32>
    %c0_10 = arith.constant 0 : index
    %c0_11 = arith.constant 0 : index
    %21 = vector.load %arg5[%c0_10, %c0_11] : memref<16x4xf32, #tpu.memory_space<vmem>>, vector<16x4xf32>
    %cst_12 = arith.constant dense<0.000000e+00> : vector<4x4xf32>
    %22 = tpu.matmul %20, %21, %cst_12 {dimension_numbers = #tpu.dot_dimension_numbers<[1], [0], [0], [1], [0, 0, 1, 1], [], []>} : vector<4x16xf32>, vector<16x4xf32>, vector<4x4xf32> -> vector<4x4xf32>
    %23 = arith.addf %19, %22 : vector<4x4xf32>
    %c1 = arith.constant 1 : index
    %24 = memref.load %arg1[%c1] : memref<2xf32, #tpu.memory_space<smem>>
    %25 = vector.broadcast %24 : f32 to vector<4x16xf32>
    %26 = arith.mulf %2, %25 : vector<4x16xf32>
    %c1_13 = arith.constant 1 : index
    %27 = memref.load %arg2[%c1_13] : memref<2xf32, #tpu.memory_space<smem>>
    %28 = vector.broadcast %27 : f32 to vector<4x16xf32>
    %29 = arith.addf %26, %28 : vector<4x16xf32>
    %cst_14 = arith.constant 0.000000e+00 : f32
    %30 = vector.broadcast %cst_14 : f32 to vector<4x16xf32>
    %31 = arith.maximumf %29, %30 : vector<4x16xf32>
    %cst_15 = arith.constant 0.000000e+00 : f32
    %32 = vector.broadcast %cst_15 : f32 to vector<4x16xf32>
    %33 = arith.minimumf %29, %32 : vector<4x16xf32>
    %34 = math.exp %33 : vector<4x16xf32>
    %cst_16 = arith.constant 1.67326319 : f32
    %35 = vector.broadcast %cst_16 : f32 to vector<4x16xf32>
    %36 = arith.mulf %35, %34 : vector<4x16xf32>
    %37 = arith.addf %31, %36 : vector<4x16xf32>
    %c0_17 = arith.constant 0 : index
    %c4 = arith.constant 4 : index
    %38 = vector.load %arg4[%c0_17, %c4] : memref<16x8xf32, #tpu.memory_space<vmem>>, vector<16x4xf32>
    %cst_18 = arith.constant dense<0.000000e+00> : vector<4x4xf32>
    %39 = tpu.matmul %37, %38, %cst_18 {dimension_numbers = #tpu.dot_dimension_numbers<[1], [0], [0], [1], [0, 0, 1, 1], [], []>} : vector<4x16xf32>, vector<16x4xf32>, vector<4x4xf32> -> vector<4x4xf32>
    %40 = arith.addf %1, %39 : vector<4x4xf32>
    %41 = arith.mulf %37, %37 : vector<4x16xf32>
    %c0_19 = arith.constant 0 : index
    %c0_20 = arith.constant 0 : index
    %42 = vector.load %arg5[%c0_19, %c0_20] : memref<16x4xf32, #tpu.memory_space<vmem>>, vector<16x4xf32>
    %cst_21 = arith.constant dense<0.000000e+00> : vector<4x4xf32>
    %43 = tpu.matmul %41, %42, %cst_21 {dimension_numbers = #tpu.dot_dimension_numbers<[1], [0], [0], [1], [0, 0, 1, 1], [], []>} : vector<4x16xf32>, vector<16x4xf32>, vector<4x4xf32> -> vector<4x4xf32>
    %44 = arith.addf %40, %43 : vector<4x4xf32>
    %45 = vector.extract_strided_slice %23 {offsets = [0, 0], sizes = [4, 2], strides = [1, 1]} : vector<4x4xf32> to vector<4x2xf32>
    %46 = vector.extract_strided_slice %44 {offsets = [0, 0], sizes = [4, 2], strides = [1, 1]} : vector<4x4xf32> to vector<4x2xf32>
    %47 = tpu.concatenate %45, %46 in 1 : vector<4x2xf32>, vector<4x2xf32> -> vector<4x4xf32>
    %c0_22 = arith.constant 0 : index
    %c0_23 = arith.constant 0 : index
    %48 = vector.load %arg6[%c0_22, %c0_23] : memref<4x4xf32, #tpu.memory_space<vmem>>, vector<4x4xf32>
    tpu.vector_store %arg6[%c0_22, %c0_23], %47 {strides = array<i32>} : memref<4x4xf32, #tpu.memory_space<vmem>>, vector<4x4xf32>,
    %49 = vector.extract_strided_slice %23 {offsets = [0, 2], sizes = [4, 2], strides = [1, 1]} : vector<4x4xf32> to vector<4x2xf32>
    %cst_24 = arith.constant dense<0.000000e+00> : vector<2xf32>
    %50 = vector.multi_reduction <add>, %49, %cst_24 [0] : vector<4x2xf32> to vector<2xf32>
    %51 = vector.shape_cast %50 : vector<2xf32> to vector<1x2xf32>
    %52 = vector.extract_strided_slice %44 {offsets = [0, 2], sizes = [4, 2], strides = [1, 1]} : vector<4x4xf32> to vector<4x2xf32>
    %cst_25 = arith.constant dense<0.000000e+00> : vector<2xf32>
    %53 = vector.multi_reduction <add>, %52, %cst_25 [0] : vector<4x2xf32> to vector<2xf32>
    %54 = vector.shape_cast %53 : vector<2xf32> to vector<1x2xf32>
    %55 = tpu.concatenate %51, %54 in 1 : vector<1x2xf32>, vector<1x2xf32> -> vector<1x4xf32>
    %56 = vector.shape_cast %55 : vector<1x4xf32> to vector<1x4xf32>
    %57 = vector.broadcast %56 : vector<1x4xf32> to vector<8x4xf32>
    %c0_26 = arith.constant 0 : index
    %c0_27 = arith.constant 0 : index
    %58 = vector.load %arg7[%c0_26, %c0_27] : memref<8x4xf32, #tpu.memory_space<vmem>>, vector<8x4xf32>
    tpu.vector_store %arg7[%c0_26, %c0_27], %57 {strides = array<i32>} : memref<8x4xf32, #tpu.memory_space<vmem>>, vector<8x4xf32>,
    return
  }
  func.func @transform_0(%arg0: i32) -> i32 {
    %c0_i32 = arith.constant 0 : i32
    %c0_i32_0 = arith.constant 0 : i32
    return %c0_i32 : i32
  }
  func.func @transform_1(%arg0: i32) -> i32 {
    %c0_i32 = arith.constant 0 : i32
    %c0_i32_0 = arith.constant 0 : i32
    return %c0_i32 : i32
  }
  func.func @transform_2(%arg0: i32) -> (i32, i32) {
    %c0_i32 = arith.constant 0 : i32
    %c0_i32_0 = arith.constant 0 : i32
    return %arg0, %c0_i32 : i32, i32
  }
  func.func @transform_3(%arg0: i32) -> (i32, i32) {
    %c0_i32 = arith.constant 0 : i32
    %c0_i32_0 = arith.constant 0 : i32
    %c0_i32_1 = arith.constant 0 : i32
    return %c0_i32, %c0_i32_0 : i32, i32
  }
  func.func @transform_4(%arg0: i32) -> (i32, i32) {
    %c0_i32 = arith.constant 0 : i32
    %c0_i32_0 = arith.constant 0 : i32
    %c0_i32_1 = arith.constant 0 : i32
    return %c0_i32, %c0_i32_0 : i32, i32
  }
  func.func @transform_5(%arg0: i32) -> (i32, i32) {
    %c0_i32 = arith.constant 0 : i32
    %c0_i32_0 = arith.constant 0 : i32
    return %arg0, %c0_i32 : i32, i32
  }
  func.func @transform_6(%arg0: i32) -> (i32, i32) {
    %c0_i32 = arith.constant 0 : i32
    %c0_i32_0 = arith.constant 0 : i32
    return %arg0, %c0_i32 : i32, i32
  }
}

</mosaic_0001>

<llo_original>
// kernel: tpu_custom_call.1
$region0: #{tpu_custom_call.1}
  #allocation0 [shape = 'u32[]', space=smem, size = 0x4, offset = 0x4, fixed_abs, tag = 'smem constant byte address 0x4 - core index']
  #allocation1 [shape = 'u32[144,128]{1,0:T(1,128)}', space=vmem, size = 0x12000, scoped, tag = 'internal scratch']
  %s0 = inlined_call_operand.vmem [shape: f32[2], index: 0, kind: input, shape index: {}]
  %s1 = inlined_call_operand.vmem [shape: f32[2], index: 1, kind: input, shape index: {}]
  %s2 = inlined_call_operand.vmem [shape: f32[4,16], index: 2, kind: input, shape index: {}]
  %s3 = inlined_call_operand.vmem [shape: f32[16,8], index: 3, kind: input, shape index: {}]
  %s4 = inlined_call_operand.vmem [shape: f32[16,4], index: 4, kind: input, shape index: {}]
  %s5 = inlined_call_operand.hbm [shape: f32[4,4], index: 5, kind: output, shape index: {0}]
  %s6 = inlined_call_operand.vmem [shape: f32[8,4], index: 6, kind: output, shape index: {1}]
  %7 = xla_tuple %s5, %s6
  %s8 = sld [smem:[#allocation0]]
  $region46: #{tpu_custom_call.1} parent=0
    _
  %s10 = ssub.s32 1, %s8
  %s11 = scalar_select 0, %s10, %s8
  $region1: #{tpu_custom_call.1} parent=0
    #allocation2 [shape = 'u8[512]{0}', space=smem, size = 0x200, scoped, tag = 'input window, operand 0, single buffered']
    #allocation3 [shape = 's32[1]{0}', space=sflag, size = 0x4, scoped, tag = 'scoped memory for tpu_custom_call.1']
    #allocation4 [shape = 's32[1]{0}', space=sflag, size = 0x4, scoped, tag = 'scoped memory for tpu_custom_call.1']
    #allocation5 [shape = 'u8[512]{0}', space=smem, size = 0x200, scoped, tag = 'input window, operand 1, single buffered']
    #allocation6 [shape = 's32[1]{0}', space=sflag, size = 0x4, scoped, tag = 'scoped memory for tpu_custom_call.1']
    #allocation7 [shape = 'u8[2048]{0}', space=vmem, size = 0x800, scoped, tag = 'output window, operand 0, single buffered']
    %12 = vsyncpa [#allocation4], 0
    %13 = vsyncpa [#allocation6], 0
    %14 = vsyncpa [#allocation3], 0
    // Predicated region
    $region2: #{tpu_custom_call.1} parent=1 // pred_check
      _
    $region3: #{tpu_custom_call.1} parent=1 // pred_check_branch
      %16 = sbr.rel (0) target = $region5
    $region4: #{tpu_custom_call.1} parent=1 // pred_region
      %s18 = ssub.s32 16, 16
      %19 = vsyncadd [#allocation4], %s18
      %s21 = sshll.u32 %s0, 4
      %s22 = int_to_ptr.vmem [resolvable:$true] %s21
      %24 = dma.vmem_to_smem %s22, 16, [#allocation2], [#allocation4]
    $region5: #{tpu_custom_call.1} parent=1 // pred_fallthru
      _
    // Predicated region
    $region6: #{tpu_custom_call.1} parent=1 // pred_check
      _
    $region7: #{tpu_custom_call.1} parent=1 // pred_check_branch
      %26 = sbr.rel (0) target = $region9
    $region8: #{tpu_custom_call.1} parent=1 // pred_region
      %s28 = ssub.s32 16, 16
      %29 = vsyncadd [#allocation6], %s28
      %s31 = sshll.u32 %s1, 4
      %s32 = int_to_ptr.vmem [resolvable:$true] %s31
      %34 = dma.vmem_to_smem %s32, 16, [#allocation5], [#allocation6]
    $region9: #{tpu_custom_call.1} parent=1 // pred_fallthru
      _
    // Predicated region
    $region10: #{tpu_custom_call.1} parent=1 // pred_check
      _
    $region11: #{tpu_custom_call.1} parent=1 // pred_check_branch
      %36 = sbr.rel (0) target = $region13
    $region12: #{tpu_custom_call.1} parent=1 // pred_region
      _
    $region13: #{tpu_custom_call.1} parent=1 // pred_fallthru
      _
    // Predicated region
    $region14: #{tpu_custom_call.1} parent=1 // pred_check
      _
    $region15: #{tpu_custom_call.1} parent=1 // pred_check_branch
      %38 = sbr.rel (0) target = $region17
    $region16: #{tpu_custom_call.1} parent=1 // pred_region
      _
    $region17: #{tpu_custom_call.1} parent=1 // pred_fallthru
      _
    // Predicated region
    $region18: #{tpu_custom_call.1} parent=1 // pred_check
      _
    $region19: #{tpu_custom_call.1} parent=1 // pred_check_branch
      %40 = sbr.rel (0) target = $region21
    $region20: #{tpu_custom_call.1} parent=1 // pred_region
      _
    $region21: #{tpu_custom_call.1} parent=1 // pred_fallthru
      _
    // Predicated region
    $region22: #{tpu_custom_call.1} parent=1 // pred_check
      _
    $region23: #{tpu_custom_call.1} parent=1 // pred_check_branch
      %42 = sbr.rel (0) target = $region25
    $region24: #{tpu_custom_call.1} parent=1 // pred_region
      %43 = dma.done [#allocation4], 16
    $region25: #{tpu_custom_call.1} parent=1 // pred_fallthru
      _
    // Predicated region
    $region26: #{tpu_custom_call.1} parent=1 // pred_check
      _
    $region27: #{tpu_custom_call.1} parent=1 // pred_check_branch
      %45 = sbr.rel (0) target = $region29
    $region28: #{tpu_custom_call.1} parent=1 // pred_region
      %46 = dma.done [#allocation6], 16
    $region29: #{tpu_custom_call.1} parent=1 // pred_fallthru
      _
    %47 = sfence
    %v48 = vld [vmem:[%s2] sm:$0xf]
    %s49 = sld [smem:[#allocation2]]
    %v50 = vstv %s49
    %v51 = vmul.f32 %v48, %v50
    %s52 = sld [smem:[#allocation5]]
    %v53 = vstv %s52
    %v54 = vadd.f32 %v51, %v53
    %v55 = vmax.f32 %v54, 0.0
    %v56 = vmin.f32 %v54, 0.0
    %v57 = vmul.f32 %v56, 1.442695
    %v58 = vpow.pop %v57
    %v59 = vmul.f32 %v58, 1.6732632
    %v60 = vadd.f32 %v55, %v59
    %v61 = vld [vmem:[%s3] sm:$0xff]
    %v62 = vld [vmem:[%s3 + $0x8] sm:$0xff]
    %v63 = vmul.f32 %v60, %v60
    %v64 = vld [vmem:[%s4] sm:$0xff]
    %v65 = vld [vmem:[%s4 + $0x8] sm:$0xff]
    %vm66 = vcmask 130048
    %v68 = vsel %vm66, %v63, 0
    %70 = vmatprep.subr.mxu0 0.0
    %71 = vmatpush1.msra.mxu0 %v64
    %72 = vmatprep.subr.mxu0 0.0
    %73 = vmatpush1.msra.mxu0 %v65
    %74 = vmatprep.subr.mxu0 0.0
    %75 = vmatpush1.msra.mxu0 0.0
    %76 = vmatprep.subr.mxu0 0.0
    %77 = vmatpush1.msra.mxu0 0.0
    %78 = vmatprep.subr.mxu0 0.0
    %79 = vmatpush1.msra.mxu0 0.0
    %80 = vmatprep.subr.mxu0 0.0
    %81 = vmatpush1.msra.mxu0 0.0
    %82 = vmatprep.subr.mxu0 0.0
    %83 = vmatpush1.msra.mxu0 0.0
    %84 = vmatprep.subr.mxu0 0.0
    %85 = vmatpush1.msra.mxu0 0.0
    %86 = vmatprep.subr.mxu0 0.0
    %87 = vmatpush1.msra.mxu0 0.0
    %88 = vmatprep.subr.mxu0 0.0
    %89 = vmatpush1.msra.mxu0 0.0
    %90 = vmatprep.subr.mxu0 0.0
    %91 = vmatpush1.msra.mxu0 0.0
    %92 = vmatprep.subr.mxu0 0.0
    %93 = vmatpush1.msra.mxu0 0.0
    %94 = vmatprep.subr.mxu0 0.0
    %95 = vmatpush1.msra.mxu0 0.0
    %96 = vmatprep.subr.mxu0 0.0
    %97 = vmatpush1.msra.mxu0 0.0
    %98 = vmatprep.subr.mxu0 0.0
    %99 = vmatpush1.msra.mxu0 0.0
    %100 = vmatprep.subr.mxu0 0.0
    %101 = vmatpush1.msra.mxu0 0.0
    %102 = vmatprep.subr.mxu0 0.0
    %103 = vmatpush1.msra.mxu0 0.0
    %104 = vmatprep.subr.mxu0 0.0
    %105 = vmatpush1.msra.mxu0 0.0
    %106 = vmatprep.subr.mxu0 0.0
    %107 = vmatpush1.msra.mxu0 0.0
    %108 = vmatprep.subr.mxu0 0.0
    %109 = vmatpush1.msra.mxu0 0.0
    %110 = vmatprep.subr.mxu0 0.0
    %111 = vmatpush1.msra.mxu0 0.0
    %112 = vmatprep.subr.mxu0 0.0
    %113 = vmatpush1.msra.mxu0 0.0
    %114 = vmatprep.subr.mxu0 0.0
    %115 = vmatpush1.msra.mxu0 0.0
    %116 = vmatprep.subr.mxu0 0.0
    %117 = vmatpush1.msra.mxu0 0.0
    %118 = vmatprep.subr.mxu0 0.0
    %119 = vmatpush1.msra.mxu0 0.0
    %120 = vmatprep.subr.mxu0 0.0
    %121 = vmatpush1.msra.mxu0 0.0
    %122 = vmatprep.subr.mxu0 0.0
    %123 = vmatpush1.msra.mxu0 0.0
    %124 = vmatprep.subr.mxu0 0.0
    %125 = vmatpush1.msra.mxu0 0.0
    %126 = vmatprep.subr.mxu0 0.0
    %127 = vmatpush1.msra.mxu0 0.0
    %128 = vmatprep.subr.mxu0 0.0
    %129 = vmatpush1.msra.mxu0 0.0
    %130 = vmatprep.subr.mxu0 0.0
    %131 = vmatpush1.msra.mxu0 0.0
    %132 = vmatprep.subr.mxu0 0.0
    %133 = vmatpush1.msra.mxu0 0.0
    %134 = vmatprep.mubr.f32.mxu0 0.0
    %135 = vmatmul.mubr.f32.gmra.mrb[0].mxu0 %v68
    %v136 = vpop.f32.mrb[0].mxu0
    %v137 = vadd.f32 0.0, %v136
    %v138 = vpop.f32.mrb[0].mxu0
    %139 = vdwg.mxu0
    %v141 = vsel %vm66, %v60, 0
    %143 = vmatprep.subr.mxu0 0.0
    %144 = vmatpush1.msra.mxu0 %v61
    %145 = vmatprep.subr.mxu0 0.0
    %146 = vmatpush1.msra.mxu0 %v62
    %147 = vmatprep.subr.mxu0 0.0
    %148 = vmatpush1.msra.mxu0 0.0
    %149 = vmatprep.subr.mxu0 0.0
    %150 = vmatpush1.msra.mxu0 0.0
    %151 = vmatprep.subr.mxu0 0.0
    %152 = vmatpush1.msra.mxu0 0.0
    %153 = vmatprep.subr.mxu0 0.0
    %154 = vmatpush1.msra.mxu0 0.0
    %155 = vmatprep.subr.mxu0 0.0
    %156 = vmatpush1.msra.mxu0 0.0
    %157 = vmatprep.subr.mxu0 0.0
    %158 = vmatpush1.msra.mxu0 0.0
    %159 = vmatprep.subr.mxu0 0.0
    %160 = vmatpush1.msra.mxu0 0.0
    %161 = vmatprep.subr.mxu0 0.0
    %162 = vmatpush1.msra.mxu0 0.0
    %163 = vmatprep.subr.mxu0 0.0
    %164 = vmatpush1.msra.mxu0 0.0
    %165 = vmatprep.subr.mxu0 0.0
    %166 = vmatpush1.msra.mxu0 0.0
    %167 = vmatprep.subr.mxu0 0.0
    %168 = vmatpush1.msra.mxu0 0.0
    %169 = vmatprep.subr.mxu0 0.0
    %170 = vmatpush1.msra.mxu0 0.0
    %171 = vmatprep.subr.mxu0 0.0
    %172 = vmatpush1.msra.mxu0 0.0
    %173 = vmatprep.subr.mxu0 0.0
    %174 = vmatpush1.msra.mxu0 0.0
    %175 = vmatprep.subr.mxu0 0.0
    %176 = vmatpush1.msra.mxu0 0.0
    %177 = vmatprep.subr.mxu0 0.0
    %178 = vmatpush1.msra.mxu0 0.0
    %179 = vmatprep.subr.mxu0 0.0
    %180 = vmatpush1.msra.mxu0 0.0
    %181 = vmatprep.subr.mxu0 0.0
    %182 = vmatpush1.msra.mxu0 0.0
    %183 = vmatprep.subr.mxu0 0.0
    %184 = vmatpush1.msra.mxu0 0.0
    %185 = vmatprep.subr.mxu0 0.0
    %186 = vmatpush1.msra.mxu0 0.0
    %187 = vmatprep.subr.mxu0 0.0
    %188 = vmatpush1.msra.mxu0 0.0
    %189 = vmatprep.subr.mxu0 0.0
    %190 = vmatpush1.msra.mxu0 0.0
    %191 = vmatprep.subr.mxu0 0.0
    %192 = vmatpush1.msra.mxu0 0.0
    %193 = vmatprep.subr.mxu0 0.0
    %194 = vmatpush1.msra.mxu0 0.0
    %195 = vmatprep.subr.mxu0 0.0
    %196 = vmatpush1.msra.mxu0 0.0
    %197 = vmatprep.subr.mxu0 0.0
    %198 = vmatpush1.msra.mxu0 0.0
    %199 = vmatprep.subr.mxu0 0.0
    %200 = vmatpush1.msra.mxu0 0.0
    %201 = vmatprep.subr.mxu0 0.0
    %202 = vmatpush1.msra.mxu0 0.0
    %203 = vmatprep.subr.mxu0 0.0
    %204 = vmatpush1.msra.mxu0 0.0
    %205 = vmatprep.subr.mxu0 0.0
    %206 = vmatpush1.msra.mxu0 0.0
    %207 = vmatprep.mubr.f32.mxu0 0.0
    %208 = vmatmul.mubr.f32.gmra.mrb[0].mxu0 %v141
    %v209 = vpop.f32.mrb[0].mxu0
    %v210 = vadd.f32 %v137, %v209
    %v211 = vpop.f32.mrb[0].mxu0
    %212 = vdwg.mxu0
    %s213 = sld [smem:[#allocation2 + $0x1]]
    %v214 = vstv %s213
    %v215 = vmul.f32 %v48, %v214
    %s216 = sld [smem:[#allocation5 + $0x1]]
    %v217 = vstv %s216
    %v218 = vadd.f32 %v215, %v217
    %v219 = vmax.f32 %v218, 0.0
    %v220 = vmin.f32 %v218, 0.0
    %v221 = vmul.f32 %v220, 1.442695
    %v222 = vpow.pop %v221
    %v223 = vmul.f32 %v222, 1.6732632
    %v224 = vadd.f32 %v219, %v223
    %v225 = vmul.f32 %v224, %v224
    %v227 = vsel %vm66, %v225, 0
    %229 = vmatprep.subr.mxu0 0.0
    %230 = vmatpush1.msra.mxu0 %v64
    %231 = vmatprep.subr.mxu0 0.0
    %232 = vmatpush1.msra.mxu0 %v65
    %233 = vmatprep.subr.mxu0 0.0
    %234 = vmatpush1.msra.mxu0 0.0
    %235 = vmatprep.subr.mxu0 0.0
    %236 = vmatpush1.msra.mxu0 0.0
    %237 = vmatprep.subr.mxu0 0.0
    %238 = vmatpush1.msra.mxu0 0.0
    %239 = vmatprep.subr.mxu0 0.0
    %240 = vmatpush1.msra.mxu0 0.0
    %241 = vmatprep.subr.mxu0 0.0
    %242 = vmatpush1.msra.mxu0 0.0
    %243 = vmatprep.subr.mxu0 0.0
    %244 = vmatpush1.msra.mxu0 0.0
    %245 = vmatprep.subr.mxu0 0.0
    %246 = vmatpush1.msra.mxu0 0.0
    %247 = vmatprep.subr.mxu0 0.0
    %248 = vmatpush1.msra.mxu0 0.0
    %249 = vmatprep.subr.mxu0 0.0
    %250 = vmatpush1.msra.mxu0 0.0
    %251 = vmatprep.subr.mxu0 0.0
    %252 = vmatpush1.msra.mxu0 0.0
    %253 = vmatprep.subr.mxu0 0.0
    %254 = vmatpush1.msra.mxu0 0.0
    %255 = vmatprep.subr.mxu0 0.0
    %256 = vmatpush1.msra.mxu0 0.0
    %257 = vmatprep.subr.mxu0 0.0
    %258 = vmatpush1.msra.mxu0 0.0
    %259 = vmatprep.subr.mxu0 0.0
    %260 = vmatpush1.msra.mxu0 0.0
    %261 = vmatprep.subr.mxu0 0.0
    %262 = vmatpush1.msra.mxu0 0.0
    %263 = vmatprep.subr.mxu0 0.0
    %264 = vmatpush1.msra.mxu0 0.0
    %265 = vmatprep.subr.mxu0 0.0
    %266 = vmatpush1.msra.mxu0 0.0
    %267 = vmatprep.subr.mxu0 0.0
    %268 = vmatpush1.msra.mxu0 0.0
    %269 = vmatprep.subr.mxu0 0.0
    %270 = vmatpush1.msra.mxu0 0.0
    %271 = vmatprep.subr.mxu0 0.0
    %272 = vmatpush1.msra.mxu0 0.0
    %273 = vmatprep.subr.mxu0 0.0
    %274 = vmatpush1.msra.mxu0 0.0
    %275 = vmatprep.subr.mxu0 0.0
    %276 = vmatpush1.msra.mxu0 0.0
    %277 = vmatprep.subr.mxu0 0.0
    %278 = vmatpush1.msra.mxu0 0.0
    %279 = vmatprep.subr.mxu0 0.0
    %280 = vmatpush1.msra.mxu0 0.0
    %281 = vmatprep.subr.mxu0 0.0
    %282 = vmatpush1.msra.mxu0 0.0
    %283 = vmatprep.subr.mxu0 0.0
    %284 = vmatpush1.msra.mxu0 0.0
    %285 = vmatprep.subr.mxu0 0.0
    %286 = vmatpush1.msra.mxu0 0.0
    %287 = vmatprep.subr.mxu0 0.0
    %288 = vmatpush1.msra.mxu0 0.0
    %289 = vmatprep.subr.mxu0 0.0
    %290 = vmatpush1.msra.mxu0 0.0
    %291 = vmatprep.subr.mxu0 0.0
    %292 = vmatpush1.msra.mxu0 0.0
    %293 = vmatprep.mubr.f32.mxu0 0.0
    %294 = vmatmul.mubr.f32.gmra.mrb[0].mxu0 %v227
    %v295 = vpop.f32.mrb[0].mxu0
    %v296 = vadd.f32 0.0, %v295
    %v297 = vpop.f32.mrb[0].mxu0
    %298 = vdwg.mxu0
    %301 = vrot.lane.b32.xlu0 %v61, 124
    %v302 = vpop.permute.xlu0 %301
    %303 = vrot.lane.b32.xlu0 %v62, 124
    %v304 = vpop.permute.xlu0 %303
    %v308 = vsel %vm66, %v224, 0
    %310 = vmatprep.subr.mxu0 0.0
    %311 = vmatpush1.msra.mxu0 %v302
    %312 = vmatprep.subr.mxu0 0.0
    %313 = vmatpush1.msra.mxu0 %v304
    %314 = vmatprep.subr.mxu0 0.0
    %315 = vmatpush1.msra.mxu0 0.0
    %316 = vmatprep.subr.mxu0 0.0
    %317 = vmatpush1.msra.mxu0 0.0
    %318 = vmatprep.subr.mxu0 0.0
    %319 = vmatpush1.msra.mxu0 0.0
    %320 = vmatprep.subr.mxu0 0.0
    %321 = vmatpush1.msra.mxu0 0.0
    %322 = vmatprep.subr.mxu0 0.0
    %323 = vmatpush1.msra.mxu0 0.0
    %324 = vmatprep.subr.mxu0 0.0
    %325 = vmatpush1.msra.mxu0 0.0
    %326 = vmatprep.subr.mxu0 0.0
    %327 = vmatpush1.msra.mxu0 0.0
    %328 = vmatprep.subr.mxu0 0.0
    %329 = vmatpush1.msra.mxu0 0.0
    %330 = vmatprep.subr.mxu0 0.0
    %331 = vmatpush1.msra.mxu0 0.0
    %332 = vmatprep.subr.mxu0 0.0
    %333 = vmatpush1.msra.mxu0 0.0
    %334 = vmatprep.subr.mxu0 0.0
    %335 = vmatpush1.msra.mxu0 0.0
    %336 = vmatprep.subr.mxu0 0.0
    %337 = vmatpush1.msra.mxu0 0.0
    %338 = vmatprep.subr.mxu0 0.0
    %339 = vmatpush1.msra.mxu0 0.0
    %340 = vmatprep.subr.mxu0 0.0
    %341 = vmatpush1.msra.mxu0 0.0
    %342 = vmatprep.subr.mxu0 0.0
    %343 = vmatpush1.msra.mxu0 0.0
    %344 = vmatprep.subr.mxu0 0.0
    %345 = vmatpush1.msra.mxu0 0.0
    %346 = vmatprep.subr.mxu0 0.0
    %347 = vmatpush1.msra.mxu0 0.0
    %348 = vmatprep.subr.mxu0 0.0
    %349 = vmatpush1.msra.mxu0 0.0
    %350 = vmatprep.subr.mxu0 0.0
    %351 = vmatpush1.msra.mxu0 0.0
    %352 = vmatprep.subr.mxu0 0.0
    %353 = vmatpush1.msra.mxu0 0.0
    %354 = vmatprep.subr.mxu0 0.0
    %355 = vmatpush1.msra.mxu0 0.0
    %356 = vmatprep.subr.mxu0 0.0
    %357 = vmatpush1.msra.mxu0 0.0
    %358 = vmatprep.subr.mxu0 0.0
    %359 = vmatpush1.msra.mxu0 0.0
    %360 = vmatprep.subr.mxu0 0.0
    %361 = vmatpush1.msra.mxu0 0.0
    %362 = vmatprep.subr.mxu0 0.0
    %363 = vmatpush1.msra.mxu0 0.0
    %364 = vmatprep.subr.mxu0 0.0
    %365 = vmatpush1.msra.mxu0 0.0
    %366 = vmatprep.subr.mxu0 0.0
    %367 = vmatpush1.msra.mxu0 0.0
    %368 = vmatprep.subr.mxu0 0.0
    %369 = vmatpush1.msra.mxu0 0.0
    %370 = vmatprep.subr.mxu0 0.0
    %371 = vmatpush1.msra.mxu0 0.0
    %372 = vmatprep.subr.mxu0 0.0
    %373 = vmatpush1.msra.mxu0 0.0
    %374 = vmatprep.mubr.f32.mxu0 0.0
    %375 = vmatmul.mubr.f32.gmra.mrb[0].mxu0 %v308
    %v376 = vpop.f32.mrb[0].mxu0
    %v377 = vadd.f32 %v296, %v376
    %v378 = vpop.f32.mrb[0].mxu0
    %379 = vdwg.mxu0
    %381 = vrot.lane.b32.xlu0 %v377, 2
    %v382 = vpop.permute.xlu0 %381
    %vm384 = vcmask 15360
    %v385 = vsel %vm384, %v210, %v382
    %vm386 = vcmask 27648
    %387 = vst.msk [vmem:[#allocation7] sm:$0xf] %vm386, %v385
    %vm388 = vcmask 27664
    %v389 = vsel %vm388, %v210, 0.0
    %v390 = vrot.slane %v389, 4
    %v391 = vadd.f32 %v389, %v390
    %v392 = vrot.slane %v391, 2
    %v393 = vadd.f32 %v391, %v392
    %v394 = vrot.slane %v393, 1
    %v395 = vadd.f32 %v393, %v394
    %v396 = vsel %vm388, %v377, 0.0
    %v397 = vrot.slane %v396, 4
    %v398 = vadd.f32 %v396, %v397
    %v399 = vrot.slane %v398, 2
    %v400 = vadd.f32 %v398, %v399
    %v401 = vrot.slane %v400, 1
    %v402 = vadd.f32 %v400, %v401
    %404 = vrot.lane.b32.xlu0 %v395, 126
    %v405 = vpop.permute.xlu0 %404
    %v407 = vsel %vm384, %v405, %v402
    %v408 = vlaneseq
    %v409 = vshrl.u32 %v408, 7
    %v410 = vsub.s32 0, %v409
    %v411 = vrot.slane %v407, %v410
    %vm412 = vcmask 31744
    %413 = vst.msk [vmem:[%s6] sm:$0xff] %vm412, %v411
    // Predicated region
    $region30: #{tpu_custom_call.1} parent=1 // pred_check
      _
    $region31: #{tpu_custom_call.1} parent=1 // pred_check_branch
      %415 = sbr.rel (0) target = $region33
    $region32: #{tpu_custom_call.1} parent=1 // pred_region
      %s417 = ssub.s32 64, 64
      %418 = vsyncadd [#allocation3], %s417
      %s420 = sshll.u32 [#allocation7], 4
      %s421 = int_to_ptr.vmem [resolvable:$true] %s420
      %423 = dma.vmem_to_hbm [thread:$0]  %s421, 64, %s5, [#allocation3]
    $region33: #{tpu_custom_call.1} parent=1 // pred_fallthru
      _
    // Predicated region
    $region34: #{tpu_custom_call.1} parent=1 // pred_check
      _
    $region35: #{tpu_custom_call.1} parent=1 // pred_check_branch
      %425 = sbr.rel (0) target = $region37
    $region36: #{tpu_custom_call.1} parent=1 // pred_region
      _
    $region37: #{tpu_custom_call.1} parent=1 // pred_fallthru
      _
    // Predicated region
    $region38: #{tpu_custom_call.1} parent=1 // pred_check
      _
    $region39: #{tpu_custom_call.1} parent=1 // pred_check_branch
      %427 = sbr.rel (0) target = $region41
    $region40: #{tpu_custom_call.1} parent=1 // pred_region
      %428 = dma.done [#allocation3], 64
    $region41: #{tpu_custom_call.1} parent=1 // pred_fallthru
      _
    // Predicated region
    $region42: #{tpu_custom_call.1} parent=1 // pred_check
      _
    $region43: #{tpu_custom_call.1} parent=1 // pred_check_branch
      %430 = sbr.rel (0) target = $region45
    $region44: #{tpu_custom_call.1} parent=1 // pred_region
      _
    $region45: #{tpu_custom_call.1} parent=1 // pred_fallthru
      _
    %431 = vsyncpa [#allocation3], 1
    %432 = vsyncpa [#allocation4], 1
    %433 = vsyncpa [#allocation6], 1

</llo_original>
